<compile_context>
chip_gen: v6e
topology: v6e:2x2x1
jax: 0.10.0
libtpu: 0.0.40
codegen_flags: <defaults>
</compile_context>

<pallas_src>
import functools

import jax
import jax.numpy as jnp
import numpy as np
from jax.experimental import pallas as pl
from jax.experimental.pallas import tpu as pltpu

# Finite, large-negative pad logit: exp() of it underflows to exactly 0 after
# max-subtraction, so padded columns contribute exactly 0 to every softmax,
# log-softmax and cross-entropy term.
_PAD_LOGIT = -1e9


def _dino_loss_kernel(student_ref, teacher_ref, center_ref,
                      loss_part_ref, center_part_ref,
                      q_sum_ref, lp0_ref,
                      *, inv_student_temp, inv_teacher_temp):
    """One grid step = (row tile r = program_id(0), student crop v = program_id(1))."""
    v = pl.program_id(1)

    # ---- student crop v: log_softmax(student / student_temp) ----------------
    s = student_ref[0].astype(jnp.float32) * inv_student_temp         # (TB, Dp)
    s_max = jnp.max(s, axis=-1, keepdims=True)
    s_shift = s - s_max
    s_sum = jnp.sum(jnp.exp(s_shift), axis=-1, keepdims=True)         # (TB, 1)
    log_p = s_shift - jnp.log(s_sum)                                  # (TB, Dp)

    def teacher_softmax():
        """softmax((teacher - center)/temp) + raw column sum (for center EMA)."""
        t = teacher_ref[0].astype(jnp.float32)                        # (TB, Dp)
        t_logits = (t - center_ref[...]) * inv_teacher_temp
        t_max = jnp.max(t_logits, axis=-1, keepdims=True)
        t_exp = jnp.exp(t_logits - t_max)
        row_sum = jnp.sum(t_exp, axis=-1, keepdims=True)              # (TB, 1)
        # Narrow (TB, 1) reciprocal + broadcast multiply instead of a
        # full-width (TB, Dp) divide.
        q = t_exp * pl.reciprocal(row_sum)                            # (TB, Dp)
        col_sum = jnp.sum(t, axis=0, keepdims=True)                   # (1, Dp)
        return q, col_sum

    @pl.when(v == 0)
    def _():
        q0, col_sum = teacher_softmax()
        q_sum_ref[...] = q0
        lp0_ref[...] = log_p                                          # hold lp_0 until q_1 exists
        self0 = jnp.sum(q0 * log_p)                                   # q_0 . log_p_0
        loss_part_ref[...] = jnp.full((1, 1, 128), self0, dtype=jnp.float32)
        center_part_ref[0] = col_sum

    @pl.when(v == 1)
    def _():
        q1, col_sum = teacher_softmax()
        q_sum = q_sum_ref[...] + q1                                   # q_0 + q_1
        q_sum_ref[...] = q_sum
        # self term for iq=1 and both cross terms involving crops 0 and 1:
        delta = jnp.sum(q1 * log_p) - jnp.sum(q_sum * (lp0_ref[...] + log_p))
        loss_part_ref[...] = loss_part_ref[...] + delta
        center_part_ref[0] = center_part_ref[0] + col_sum

    @pl.when(v >= 2)
    def _():
        # Incremental cross term: -(q_0 + q_1) . log_p_v
        loss_part_ref[...] = loss_part_ref[...] - jnp.sum(q_sum_ref[...] * log_p)


def _pick_row_tile(batch, d_pad, budget_bytes=34 * 1024 * 1024):
    """Largest batch-row tile whose per-step f32 VMEM footprint fits the budget.

    Dominant live buffers per step: 2 double-buffered (TB, Dp) input blocks
    (student, teacher) + 2 (TB, Dp) scratch accumulators ~= 6 copies.
    Sized conservatively so the same code runs on v7x's 64 MiB VMEM.
    """
    cap = max(8, budget_bytes // (6 * d_pad * 4))
    if batch <= cap:
        return batch                      # full dim -> always a legal block
    for tb in range(min(batch, cap), 0, -1):
        if batch % tb == 0 and tb % 8 == 0:
            return tb
    # No sublane-aligned divisor fits the budget: fall back to the full batch
    # (correct, just uses more VMEM); only hit for pathological batch sizes.
    return batch


class DINOLossPallas:
    """JAX/Pallas port of the PyTorch DINOLoss module (forward semantics)."""

    def __init__(self, out_dim, ncrops, warmup_teacher_temp, teacher_temp,
                 warmup_teacher_temp_epochs, nepochs,
                 student_temp=0.1, center_momentum=0.9):
        assert ncrops >= 2, "DINO requires at least the 2 global crops"
        self.student_temp = float(student_temp)
        self.center_momentum = float(center_momentum)
        self.ncrops = int(ncrops)
        self.out_dim = int(out_dim)
        # buffer: center, deterministically initialized to zeros (as in __init__)
        self.center = jnp.zeros((1, out_dim), dtype=jnp.float32)
        self.teacher_temp_schedule = np.concatenate((
            np.linspace(warmup_teacher_temp, teacher_temp, warmup_teacher_temp_epochs),
            np.ones(nepochs - warmup_teacher_temp_epochs) * teacher_temp,
        )).astype(np.float32)

    def __call__(self, student_output, teacher_output, epoch):
        n_student, d = student_output.shape
        n_teacher, d2 = teacher_output.shape
        assert d == d2 == self.out_dim
        assert n_student % self.ncrops == 0
        batch = n_student // self.ncrops
        assert n_teacher == 2 * batch

        # ---- lane-dense feature axis: pad D to a multiple of 128 ------------
        d_pad = max(128, ((d + 127) // 128) * 128)
        pad = d_pad - d
        student = student_output
        teacher = teacher_output
        center = self.center
        if pad:
            student = jnp.pad(student, ((0, 0), (0, pad)), constant_values=_PAD_LOGIT)
            teacher = jnp.pad(teacher, ((0, 0), (0, pad)), constant_values=_PAD_LOGIT)
            center = jnp.pad(center, ((0, 0), (0, pad)))  # zeros

        # leading-axis crop indexing (free XLA reshape, trivial index_maps)
        student = student.reshape(self.ncrops, batch, d_pad)
        teacher = teacher.reshape(2, batch, d_pad)

        tb = _pick_row_tile(batch, d_pad)
        num_rt = batch // tb
        n_terms = 2 * (self.ncrops - 1)

        # Temperatures are host-side (epoch indexes a numpy schedule, exactly as
        # in the PyTorch module) -> bake their reciprocals as constants.
        teacher_temp = float(self.teacher_temp_schedule[int(epoch)])
        kernel = functools.partial(
            _dino_loss_kernel,
            inv_student_temp=float(1.0 / self.student_temp),
            inv_teacher_temp=float(1.0 / teacher_temp),
        )

        loss_parts, center_parts = pl.pallas_call(
            kernel,
            out_shape=(
                jax.ShapeDtypeStruct((num_rt, 1, 128), jnp.float32),    # per-tile loss partials
                jax.ShapeDtypeStruct((num_rt, 1, d_pad), jnp.float32),  # per-tile teacher col sums
            ),
            grid_spec=pltpu.PrefetchScalarGridSpec(
                num_scalar_prefetch=0,
                grid=(num_rt, self.ncrops),
                in_specs=[
                    pl.BlockSpec((1, tb, d_pad), lambda r, v: (v, r, 0)),    # student crop v
                    pl.BlockSpec((1, tb, d_pad),
                                 lambda r, v: (jnp.minimum(v, 1), r, 0)),    # teacher crop min(v,1)
                    pl.BlockSpec((1, d_pad), lambda r, v: (0, 0)),           # center (resident)
                ],
                out_specs=(
                    pl.BlockSpec((1, 1, 128), lambda r, v: (r, 0, 0)),       # loss partial
                    pl.BlockSpec((1, 1, d_pad), lambda r, v: (r, 0, 0)),     # teacher col sum
                ),
                scratch_shapes=[
                    pltpu.VMEM((tb, d_pad), jnp.float32),   # q_0 + q_1
                    pltpu.VMEM((tb, d_pad), jnp.float32),   # log_p of crop 0
                ],
            ),
            compiler_params=pltpu.CompilerParams(
                dimension_semantics=("parallel", "arbitrary"),   # row tiles across TCs
                vmem_limit_bytes=48 * 1024 * 1024,
            ),
        )(student, teacher, center)

        # ---- tiny XLA epilogue: combine per-row-tile partials ----------------
        loss = jnp.sum(loss_parts[:, 0, 0]) / jnp.float32(batch * n_terms)

        # center EMA update (side effect of forward(); single-device semantics,
        # exactly matching the reference module's update_center).
        batch_center = (jnp.sum(center_parts[:, 0, :], axis=0, keepdims=True)[:, :d]
                        / jnp.float32(n_teacher))
        self.center = (self.center * self.center_momentum
                       + batch_center * (1.0 - self.center_momentum))
        return loss


def _reference(student_output, teacher_output, center, temp, ncrops, student_temp):
    """Plain-JAX reference mirroring the PyTorch module."""
    student = student_output / student_temp
    batch = student_output.shape[0] // ncrops
    q = jax.nn.softmax((teacher_output - center) / temp, axis=-1)
    log_p = jax.nn.log_softmax(student, axis=-1)
    total, n = 0.0, 0
    for iq in range(2):
        qc = q[iq * batch:(iq + 1) * batch]
        for v in range(ncrops):
            if v == iq:
                continue
            lp = log_p[v * batch:(v + 1) * batch]
            total += jnp.mean(jnp.sum(-qc * lp, axis=-1))
            n += 1
    return total / n


if __name__ == "__main__":
    def run_case(out_dim, ncrops, batch, epoch):
        loss_mod = DINOLossPallas(
            out_dim=out_dim, ncrops=ncrops,
            warmup_teacher_temp=0.04, teacher_temp=0.07,
            warmup_teacher_temp_epochs=5, nepochs=10,
            student_temp=0.1, center_momentum=0.9,
        )
        key = jax.random.PRNGKey(0)
        k1, k2 = jax.random.split(key)
        student_output = jax.random.normal(k1, (ncrops * batch, out_dim), dtype=jnp.float32)
        teacher_output = jax.random.normal(k2, (2 * batch, out_dim), dtype=jnp.float32)

        init_center = loss_mod.center
        loss = loss_mod(student_output, teacher_output, epoch)
        loss = jax.block_until_ready(loss)
        new_center = jax.block_until_ready(loss_mod.center)

        temp = float(loss_mod.teacher_temp_schedule[epoch])
        ref_loss = _reference(student_output, teacher_output, init_center,
                              temp, ncrops, loss_mod.student_temp)
        ref_center = (init_center * loss_mod.center_momentum
                      + (jnp.sum(teacher_output, axis=0, keepdims=True)
                         / teacher_output.shape[0]) * (1.0 - loss_mod.center_momentum))
        assert jnp.allclose(loss, ref_loss, rtol=1e-4, atol=1e-5), \
            (out_dim, ncrops, batch, float(loss), float(ref_loss))
        assert jnp.allclose(new_center, ref_center, rtol=1e-4, atol=1e-5), \
            (out_dim, ncrops, batch)

    # lane-dense feature dim (D % 128 == 0), multiple local crops
    run_case(out_dim=128, ncrops=4, batch=8, epoch=3)
    # padded feature dim (D=64 -> 128) and the minimal ncrops=2 edge case
    run_case(out_dim=64, ncrops=2, batch=16, epoch=7)

    print("KERNEL_OK")
</pallas_src>

<mosaic_0001>
module attributes {stable_mosaic.version = 11 : i64} {
  func.func @_dino_loss_kernel(%arg0: i32, %arg1: i32, %arg2: memref<1x8x128xf32, #tpu.memory_space<vmem>>, %arg3: memref<1x8x128xf32, #tpu.memory_space<vmem>>, %arg4: memref<1x128xf32, #tpu.memory_space<vmem>>, %arg5: memref<1x1x128xf32, #tpu.memory_space<vmem>>, %arg6: memref<1x1x128xf32, #tpu.memory_space<vmem>>, %arg7: memref<8x128xf32, #tpu.memory_space<vmem>>, %arg8: memref<8x128xf32, #tpu.memory_space<vmem>>) attributes {dimension_semantics = [#tpu.dimension_semantics<parallel>, #tpu.dimension_semantics<arbitrary>], iteration_bounds = array<i64: 1, 4>, scalar_prefetch = 0 : i64, scratch_operands = 2 : i64, tpu.core_type = #tpu.core_type<tc>, window_params = [{transform_indices = @transform_0, window_bounds = array<i64: 1, 8, 128>}, {transform_indices = @transform_1, window_bounds = array<i64: 1, 8, 128>}, {pipeline_mode = #tpu.pipeline_mode<synchronous>, transform_indices = @transform_2, window_bounds = array<i64: 1, 128>}, {transform_indices = @transform_3, window_bounds = array<i64: 1, 1, 128>}, {transform_indices = @transform_4, window_bounds = array<i64: 1, 1, 128>}]} {
    %c0 = arith.constant 0 : index
    %c0_0 = arith.constant 0 : index
    %c0_1 = arith.constant 0 : index
    %0 = vector.load %arg2[%c0, %c0_0, %c0_1] : memref<1x8x128xf32, #tpu.memory_space<vmem>>, vector<1x8x128xf32>
    %1 = vector.shape_cast %0 : vector<1x8x128xf32> to vector<8x128xf32>
    %cst = arith.constant 1.000000e+01 : f32
    %2 = vector.broadcast %cst : f32 to vector<8x128xf32>
    %3 = arith.mulf %1, %2 : vector<8x128xf32>
    %cst_2 = arith.constant dense<0xFF800000> : vector<8xf32>
    %4 = vector.multi_reduction <maximumf>, %3, %cst_2 [1] : vector<8x128xf32> to vector<8xf32>
    %5 = vector.shape_cast %4 : vector<8xf32> to vector<8x1xf32>
    %6 = vector.broadcast %5 : vector<8x1xf32> to vector<8x128xf32>
    %7 = arith.subf %3, %6 : vector<8x128xf32>
    %8 = math.exp %7 : vector<8x128xf32>
    %cst_3 = arith.constant dense<0.000000e+00> : vector<8xf32>
    %9 = vector.multi_reduction <add>, %8, %cst_3 [1] : vector<8x128xf32> to vector<8xf32>
    %10 = vector.shape_cast %9 : vector<8xf32> to vector<8x1xf32>
    %11 = math.log %10 : vector<8x1xf32>
    %12 = vector.broadcast %11 : vector<8x1xf32> to vector<8x128xf32>
    %13 = arith.subf %7, %12 : vector<8x128xf32>
    %c0_i32 = arith.constant 0 : i32
    %14 = arith.cmpi eq, %arg1, %c0_i32 : i32
    %15 = arith.extui %14 : i1 to i32
    %c0_i32_4 = arith.constant 0 : i32
    %16 = arith.cmpi ne, %15, %c0_i32_4 : i32
    scf.if %16 {
      %c0_7 = arith.constant 0 : index
      %c0_8 = arith.constant 0 : index
      %c0_9 = arith.constant 0 : index
      %23 = vector.load %arg3[%c0_7, %c0_8, %c0_9] : memref<1x8x128xf32, #tpu.memory_space<vmem>>, vector<1x8x128xf32>
      %24 = vector.shape_cast %23 : vector<1x8x128xf32> to vector<8x128xf32>
      %c0_10 = arith.constant 0 : index
      %c0_11 = arith.constant 0 : index
      %25 = vector.load %arg4[%c0_10, %c0_11] : memref<1x128xf32, #tpu.memory_space<vmem>>, vector<1x128xf32>
      %26 = vector.broadcast %25 : vector<1x128xf32> to vector<8x128xf32>
      %27 = arith.subf %24, %26 : vector<8x128xf32>
      %cst_12 = arith.constant 1.600000e+01 : f32
      %28 = vector.broadcast %cst_12 : f32 to vector<8x128xf32>
      %29 = arith.mulf %27, %28 : vector<8x128xf32>
      %cst_13 = arith.constant dense<0xFF800000> : vector<8xf32>
      %30 = vector.multi_reduction <maximumf>, %29, %cst_13 [1] : vector<8x128xf32> to vector<8xf32>
      %31 = vector.shape_cast %30 : vector<8xf32> to vector<8x1xf32>
      %32 = vector.broadcast %31 : vector<8x1xf32> to vector<8x128xf32>
      %33 = arith.subf %29, %32 : vector<8x128xf32>
      %34 = math.exp %33 : vector<8x128xf32>
      %cst_14 = arith.constant dense<0.000000e+00> : vector<8xf32>
      %35 = vector.multi_reduction <add>, %34, %cst_14 [1] : vector<8x128xf32> to vector<8xf32>
      %36 = vector.shape_cast %35 : vector<8xf32> to vector<8x1xf32>
      %37 = tpu.reciprocal %36 : vector<8x1xf32> -> vector<8x1xf32>
      %38 = vector.broadcast %37 : vector<8x1xf32> to vector<8x128xf32>
      %39 = arith.mulf %34, %38 : vector<8x128xf32>
      %cst_15 = arith.constant dense<0.000000e+00> : vector<128xf32>
      %40 = vector.multi_reduction <add>, %24, %cst_15 [0] : vector<8x128xf32> to vector<128xf32>
      %41 = vector.shape_cast %40 : vector<128xf32> to vector<1x128xf32>
      %c0_16 = arith.constant 0 : index
      %c0_17 = arith.constant 0 : index
      %42 = vector.load %arg7[%c0_16, %c0_17] : memref<8x128xf32, #tpu.memory_space<vmem>>, vector<8x128xf32>
      tpu.vector_store %arg7[%c0_16, %c0_17], %39 {strides = array<i32>} : memref<8x128xf32, #tpu.memory_space<vmem>>, vector<8x128xf32>,
      %c0_18 = arith.constant 0 : index
      %c0_19 = arith.constant 0 : index
      %43 = vector.load %arg8[%c0_18, %c0_19] : memref<8x128xf32, #tpu.memory_space<vmem>>, vector<8x128xf32>
      tpu.vector_store %arg8[%c0_18, %c0_19], %13 {strides = array<i32>} : memref<8x128xf32, #tpu.memory_space<vmem>>, vector<8x128xf32>,
      %44 = arith.mulf %39, %13 : vector<8x128xf32>
      %45 = vector.shape_cast %44 : vector<8x128xf32> to vector<1x8x128xf32>
      %cst_20 = arith.constant dense<0.000000e+00> : vector<1xf32>
      %46 = vector.multi_reduction <add>, %45, %cst_20 [1, 2] : vector<1x8x128xf32> to vector<1xf32>
      %47 = vector.shape_cast %46 : vector<1xf32> to vector<1x1x1xf32>
      %48 = vector.extract %47[0, 0, 0] : f32 from vector<1x1x1xf32>
      %49 = vector.broadcast %48 : f32 to vector<1x1x128xf32>
      %c0_21 = arith.constant 0 : index
      %c0_22 = arith.constant 0 : index
      %c0_23 = arith.constant 0 : index
      %50 = vector.load %arg5[%c0_21, %c0_22, %c0_23] : memref<1x1x128xf32, #tpu.memory_space<vmem>>, vector<1x1x128xf32>
      tpu.vector_store %arg5[%c0_21, %c0_22, %c0_23], %49 {strides = array<i32>} : memref<1x1x128xf32, #tpu.memory_space<vmem>>, vector<1x1x128xf32>,
      %c0_24 = arith.constant 0 : index
      %c0_25 = arith.constant 0 : index
      %c0_26 = arith.constant 0 : index
      %51 = vector.load %arg6[%c0_24, %c0_25, %c0_26] : memref<1x1x128xf32, #tpu.memory_space<vmem>>, vector<1x1x128xf32>
      %52 = vector.shape_cast %51 : vector<1x1x128xf32> to vector<1x128xf32>
      %53 = vector.shape_cast %41 : vector<1x128xf32> to vector<1x1x128xf32>
      tpu.vector_store %arg6[%c0_24, %c0_25, %c0_26], %53 {strides = array<i32>} : memref<1x1x128xf32, #tpu.memory_space<vmem>>, vector<1x1x128xf32>,
    } else {
    }
    %c1_i32 = arith.constant 1 : i32
    %17 = arith.cmpi eq, %arg1, %c1_i32 : i32
    %18 = arith.extui %17 : i1 to i32
    %c0_i32_5 = arith.constant 0 : i32
    %19 = arith.cmpi ne, %18, %c0_i32_5 : i32
    scf.if %19 {
      %c0_7 = arith.constant 0 : index
      %c0_8 = arith.constant 0 : index
      %c0_9 = arith.constant 0 : index
      %23 = vector.load %arg3[%c0_7, %c0_8, %c0_9] : memref<1x8x128xf32, #tpu.memory_space<vmem>>, vector<1x8x128xf32>
      %24 = vector.shape_cast %23 : vector<1x8x128xf32> to vector<8x128xf32>
      %c0_10 = arith.constant 0 : index
      %c0_11 = arith.constant 0 : index
      %25 = vector.load %arg4[%c0_10, %c0_11] : memref<1x128xf32, #tpu.memory_space<vmem>>, vector<1x128xf32>
      %26 = vector.broadcast %25 : vector<1x128xf32> to vector<8x128xf32>
      %27 = arith.subf %24, %26 : vector<8x128xf32>
      %cst_12 = arith.constant 1.600000e+01 : f32
      %28 = vector.broadcast %cst_12 : f32 to vector<8x128xf32>
      %29 = arith.mulf %27, %28 : vector<8x128xf32>
      %cst_13 = arith.constant dense<0xFF800000> : vector<8xf32>
      %30 = vector.multi_reduction <maximumf>, %29, %cst_13 [1] : vector<8x128xf32> to vector<8xf32>
      %31 = vector.shape_cast %30 : vector<8xf32> to vector<8x1xf32>
      %32 = vector.broadcast %31 : vector<8x1xf32> to vector<8x128xf32>
      %33 = arith.subf %29, %32 : vector<8x128xf32>
      %34 = math.exp %33 : vector<8x128xf32>
      %cst_14 = arith.constant dense<0.000000e+00> : vector<8xf32>
      %35 = vector.multi_reduction <add>, %34, %cst_14 [1] : vector<8x128xf32> to vector<8xf32>
      %36 = vector.shape_cast %35 : vector<8xf32> to vector<8x1xf32>
      %37 = tpu.reciprocal %36 : vector<8x1xf32> -> vector<8x1xf32>
      %38 = vector.broadcast %37 : vector<8x1xf32> to vector<8x128xf32>
      %39 = arith.mulf %34, %38 : vector<8x128xf32>
      %cst_15 = arith.constant dense<0.000000e+00> : vector<128xf32>
      %40 = vector.multi_reduction <add>, %24, %cst_15 [0] : vector<8x128xf32> to vector<128xf32>
      %41 = vector.shape_cast %40 : vector<128xf32> to vector<1x128xf32>
      %c0_16 = arith.constant 0 : index
      %c0_17 = arith.constant 0 : index
      %42 = vector.load %arg7[%c0_16, %c0_17] : memref<8x128xf32, #tpu.memory_space<vmem>>, vector<8x128xf32>
      %43 = arith.addf %42, %39 : vector<8x128xf32>
      %c0_18 = arith.constant 0 : index
      %c0_19 = arith.constant 0 : index
      %44 = vector.load %arg7[%c0_18, %c0_19] : memref<8x128xf32, #tpu.memory_space<vmem>>, vector<8x128xf32>
      tpu.vector_store %arg7[%c0_18, %c0_19], %43 {strides = array<i32>} : memref<8x128xf32, #tpu.memory_space<vmem>>, vector<8x128xf32>,
      %45 = arith.mulf %39, %13 : vector<8x128xf32>
      %46 = vector.shape_cast %45 : vector<8x128xf32> to vector<1x8x128xf32>
      %cst_20 = arith.constant dense<0.000000e+00> : vector<1xf32>
      %47 = vector.multi_reduction <add>, %46, %cst_20 [1, 2] : vector<1x8x128xf32> to vector<1xf32>
      %48 = vector.shape_cast %47 : vector<1xf32> to vector<1x1x1xf32>
      %49 = vector.extract %48[0, 0, 0] : f32 from vector<1x1x1xf32>
      %c0_21 = arith.constant 0 : index
      %c0_22 = arith.constant 0 : index
      %50 = vector.load %arg8[%c0_21, %c0_22] : memref<8x128xf32, #tpu.memory_space<vmem>>, vector<8x128xf32>
      %51 = arith.addf %50, %13 : vector<8x128xf32>
      %52 = arith.mulf %43, %51 : vector<8x128xf32>
      %53 = vector.shape_cast %52 : vector<8x128xf32> to vector<1x8x128xf32>
      %cst_23 = arith.constant dense<0.000000e+00> : vector<1xf32>
      %54 = vector.multi_reduction <add>, %53, %cst_23 [1, 2] : vector<1x8x128xf32> to vector<1xf32>
      %55 = vector.shape_cast %54 : vector<1xf32> to vector<1x1x1xf32>
      %56 = vector.extract %55[0, 0, 0] : f32 from vector<1x1x1xf32>
      %57 = arith.subf %49, %56 : f32
      %c0_24 = arith.constant 0 : index
      %c0_25 = arith.constant 0 : index
      %c0_26 = arith.constant 0 : index
      %58 = vector.load %arg5[%c0_24, %c0_25, %c0_26] : memref<1x1x128xf32, #tpu.memory_space<vmem>>, vector<1x1x128xf32>
      %59 = vector.broadcast %57 : f32 to vector<1x1x128xf32>
      %60 = arith.addf %58, %59 : vector<1x1x128xf32>
      %c0_27 = arith.constant 0 : index
      %c0_28 = arith.constant 0 : index
      %c0_29 = arith.constant 0 : index
      %61 = vector.load %arg5[%c0_27, %c0_28, %c0_29] : memref<1x1x128xf32, #tpu.memory_space<vmem>>, vector<1x1x128xf32>
      tpu.vector_store %arg5[%c0_27, %c0_28, %c0_29], %60 {strides = array<i32>} : memref<1x1x128xf32, #tpu.memory_space<vmem>>, vector<1x1x128xf32>,
      %c0_30 = arith.constant 0 : index
      %c0_31 = arith.constant 0 : index
      %c0_32 = arith.constant 0 : index
      %62 = vector.load %arg6[%c0_30, %c0_31, %c0_32] : memref<1x1x128xf32, #tpu.memory_space<vmem>>, vector<1x1x128xf32>
      %63 = vector.shape_cast %62 : vector<1x1x128xf32> to vector<1x128xf32>
      %64 = arith.addf %63, %41 : vector<1x128xf32>
      %c0_33 = arith.constant 0 : index
      %c0_34 = arith.constant 0 : index
      %c0_35 = arith.constant 0 : index
      %65 = vector.load %arg6[%c0_33, %c0_34, %c0_35] : memref<1x1x128xf32, #tpu.memory_space<vmem>>, vector<1x1x128xf32>
      %66 = vector.shape_cast %65 : vector<1x1x128xf32> to vector<1x128xf32>
      %67 = vector.shape_cast %64 : vector<1x128xf32> to vector<1x1x128xf32>
      tpu.vector_store %arg6[%c0_33, %c0_34, %c0_35], %67 {strides = array<i32>} : memref<1x1x128xf32, #tpu.memory_space<vmem>>, vector<1x1x128xf32>,
    } else {
    }
    %c2_i32 = arith.constant 2 : i32
    %20 = arith.cmpi sge, %arg1, %c2_i32 : i32
    %21 = arith.extui %20 : i1 to i32
    %c0_i32_6 = arith.constant 0 : i32
    %22 = arith.cmpi ne, %21, %c0_i32_6 : i32
    scf.if %22 {
      %c0_7 = arith.constant 0 : index
      %c0_8 = arith.constant 0 : index
      %c0_9 = arith.constant 0 : index
      %23 = vector.load %arg5[%c0_7, %c0_8, %c0_9] : memref<1x1x128xf32, #tpu.memory_space<vmem>>, vector<1x1x128xf32>
      %c0_10 = arith.constant 0 : index
      %c0_11 = arith.constant 0 : index
      %24 = vector.load %arg7[%c0_10, %c0_11] : memref<8x128xf32, #tpu.memory_space<vmem>>, vector<8x128xf32>
      %25 = arith.mulf %24, %13 : vector<8x128xf32>
      %26 = vector.shape_cast %25 : vector<8x128xf32> to vector<1x8x128xf32>
      %cst_12 = arith.constant dense<0.000000e+00> : vector<1xf32>
      %27 = vector.multi_reduction <add>, %26, %cst_12 [1, 2] : vector<1x8x128xf32> to vector<1xf32>
      %28 = vector.shape_cast %27 : vector<1xf32> to vector<1x1x1xf32>
      %29 = vector.extract %28[0, 0, 0] : f32 from vector<1x1x1xf32>
      %30 = vector.broadcast %29 : f32 to vector<1x1x128xf32>
      %31 = arith.subf %23, %30 : vector<1x1x128xf32>
      %c0_13 = arith.constant 0 : index
      %c0_14 = arith.constant 0 : index
      %c0_15 = arith.constant 0 : index
      %32 = vector.load %arg5[%c0_13, %c0_14, %c0_15] : memref<1x1x128xf32, #tpu.memory_space<vmem>>, vector<1x1x128xf32>
      tpu.vector_store %arg5[%c0_13, %c0_14, %c0_15], %31 {strides = array<i32>} : memref<1x1x128xf32, #tpu.memory_space<vmem>>, vector<1x1x128xf32>,
    } else {
    }
    return
  }
  func.func @transform_0(%arg0: i32, %arg1: i32) -> (i32, i32, i32) {
    %c0_i32 = arith.constant 0 : i32
    %c0_i32_0 = arith.constant 0 : i32
    return %arg1, %arg0, %c0_i32 : i32, i32, i32
  }
  func.func @transform_1(%arg0: i32, %arg1: i32) -> (i32, i32, i32) {
    %c1_i32 = arith.constant 1 : i32
    %0 = arith.minsi %arg1, %c1_i32 : i32
    %c0_i32 = arith.constant 0 : i32
    %c0_i32_0 = arith.constant 0 : i32
    return %0, %arg0, %c0_i32 : i32, i32, i32
  }
  func.func @transform_2(%arg0: i32, %arg1: i32) -> (i32, i32) {
    %c0_i32 = arith.constant 0 : i32
    %c0_i32_0 = arith.constant 0 : i32
    %c0_i32_1 = arith.constant 0 : i32
    return %c0_i32, %c0_i32_0 : i32, i32
  }
  func.func @transform_3(%arg0: i32, %arg1: i32) -> (i32, i32, i32) {
    %c0_i32 = arith.constant 0 : i32
    %c0_i32_0 = arith.constant 0 : i32
    %c0_i32_1 = arith.constant 0 : i32
    return %arg0, %c0_i32, %c0_i32_0 : i32, i32, i32
  }
  func.func @transform_4(%arg0: i32, %arg1: i32) -> (i32, i32, i32) {
    %c0_i32 = arith.constant 0 : i32
    %c0_i32_0 = arith.constant 0 : i32
    %c0_i32_1 = arith.constant 0 : i32
    return %arg0, %c0_i32, %c0_i32_0 : i32, i32, i32
  }
}

</mosaic_0001>

<llo_original>
// kernel: tpu_custom_call.1
$region0: #{tpu_custom_call.1}
  #allocation0 [shape = 'u32[]', space=smem, size = 0x4, offset = 0x4, fixed_abs, tag = 'smem constant byte address 0x4 - core index']
  #allocation1 [shape = 'u32[144,128]{1,0:T(1,128)}', space=vmem, size = 0x12000, scoped, tag = 'internal scratch']
  #allocation2 [shape = 'f32[8,128]{1,0:T(8,128)}', space=vmem, size = 0x1000, scoped, tag = 'scratch operand']
  #allocation3 [shape = 'f32[8,128]{1,0:T(8,128)}', space=vmem, size = 0x1000, scoped, tag = 'scratch operand']
  %s0 = inlined_call_operand.hbm [shape: f32[4,8,128], index: 0, kind: input, shape index: {}]
  %s1 = inlined_call_operand.hbm [shape: f32[2,8,128], index: 1, kind: input, shape index: {}]
  %s2 = inlined_call_operand.vmem [shape: f32[1,128], index: 2, kind: input, shape index: {}]
  %s3 = inlined_call_operand.hbm [shape: f32[1,1,128], index: 3, kind: output, shape index: {0}]
  %s4 = inlined_call_operand.hbm [shape: f32[1,1,128], index: 4, kind: output, shape index: {1}]
  %5 = xla_tuple %s3, %s4
  %s6 = sld [smem:[#allocation0]]
  $region73: #{tpu_custom_call.1} parent=0
    _
  %s8 = ssub.s32 1, %s6
  %s9 = scalar_select 0, %s8, %s6
  $region1: #{tpu_custom_call.1} parent=0
    #allocation4 [shape = 'u8[8192]{0}', space=vmem, size = 0x2000, scoped, tag = 'input window, operand 0']
    #allocation5 [shape = 's32[2]{0}', space=sflag, size = 0x8, scoped, tag = 'scoped memory for tpu_custom_call.1']
    #allocation6 [shape = 's32[2]{0}', space=sflag, size = 0x8, scoped, tag = 'scoped memory for tpu_custom_call.1']
    #allocation7 [shape = 'u8[8192]{0}', space=vmem, size = 0x2000, scoped, tag = 'input window, operand 1']
    #allocation8 [shape = 's32[2]{0}', space=sflag, size = 0x8, scoped, tag = 'scoped memory for tpu_custom_call.1']
    #allocation9 [shape = 'u8[512]{0}', space=vmem, size = 0x400, scoped, tag = 'output window, operand 0, single buffered']
    #allocation10 [shape = 'u8[512]{0}', space=vmem, size = 0x400, scoped, tag = 'output window, operand 1, single buffered']
    #allocation11 [shape = 's32[1]{0}', space=sflag, size = 0x4, scoped, tag = 'scoped memory for tpu_custom_call.1']
    %10 = vsyncpa [#allocation5], 0
    %s11 = scalar_lea.sflag [#allocation5], 1
    %12 = vsyncpa %s11, 0
    %13 = vsyncpa [#allocation8], 0
    %s14 = scalar_lea.sflag [#allocation8], 1
    %15 = vsyncpa %s14, 0
    %16 = vsyncpa [#allocation6], 0
    %17 = vsyncpa [#allocation11], 0
    loop: start=0, step=1, limit=6
    $region2: #{tpu_custom_call.1} parent=1 // loop_pre_header
      _
    $region3: #{tpu_custom_call.1} parent=1 // loop_header
      %s19 = sphi 0, %s23
      %p20 = scmp.ge.s32.totalorder %s19, 6
      %s26 = sphi 0, %s38
      %s27 = sphi 0, %s34
      %s28 = sphi 0, %s26
      %s29 = sphi 0, %s27
      %s30 = sphi 0, %s28
      %s31 = sphi 0, %s29
      %s43 = sphi 0, %s45
      %s46 = sphi 0, %s43
      %s47 = sphi 0, %s46
      %s63 = sphi 0, %s47
      %s75 = sphi 0, %s77
      %s78 = sphi 0, %s75
      %s79 = sphi 0, %s78
      %s95 = sphi 0, %s79
      %s99 = sphi 0, %s99
      %s101 = sphi 0, %s99
      %s102 = sphi 0, %s101
      %s116 = sphi 0, %s102
      %s122 = sphi 0, %s124
      %s125 = sphi 0, %s122
      %s126 = sphi 0, %s125
      %s142 = sphi 0, %s126
      %s148 = sphi 0, %s150
      %s151 = sphi 0, %s148
      %s152 = sphi 0, %s151
      %s168 = sphi 0, %s152
    $region4: #{tpu_custom_call.1} parent=1 // loop_header_branch
      %22 = sbr.rel (%p20) target = $region8
    $region5: #{tpu_custom_call.1} parent=1 // loop_body
      %s24 = ssub.s32 %s19, 1
      %s25 = ssub.s32 %s19, 2
      %s32 = sadd.s32 1, %s27
      %p33 = scmp.ge.s32.totalorder %s32, 4
      %s34 = scalar_select %p33, 0, %s32
      %s35 = sadd.s32 1, %s26
      %s36 = scalar_select %p33, %s35, %s26
      %p37 = scmp.ge.s32.totalorder %s36, 1
      %s38 = scalar_select %p37, 0, %s36
      %s39 = ssub.s32 %s27, %s34
      %s40 = ssub.s32 %s26, %s38
      %s41 = sor.u32 %s39, %s40
      %p42 = scmp.eq.s32.totalorder %s41, 0
      %s44 = sadd.s32 %s43, 1
      %s45 = scalar_select %p42, %s43, %s44
      %p48 = pneg %p42
      %p49 = scmp.eq.s32.totalorder %s19, 3
      %p50 = por %p48, %p49
      %p51 = scmp.ne.s32.totalorder %s43, %s46
      %p52 = scmp.eq.s32.totalorder %s19, 0
      %p53 = por %p51, %p52
      %p54 = scmp.ne.s32.totalorder %s43, %s46
      %p55 = scmp.eq.s32.totalorder %s24, 3
      %p56 = por %p54, %p55
      %p57 = scmp.ne.s32.totalorder %s46, %s47
      %p58 = scmp.eq.s32.totalorder %s24, 0
      %p59 = por %p57, %p58
      %p60 = scmp.ne.s32.totalorder %s46, %s47
      %p61 = scmp.eq.s32.totalorder %s25, 3
      %p62 = por %p60, %p61
      %p64 = scmp.ne.s32.totalorder %s47, %s63
      %p65 = scmp.eq.s32.totalorder %s25, 0
      %p66 = por %p64, %p65
      %p67 = scmp.lt.s32.totalorder %s27, 1
      %s68 = scalar_select %p67, %s27, 1
      %p69 = scmp.lt.s32.totalorder %s34, 1
      %s70 = scalar_select %p69, %s34, 1
      %s71 = ssub.s32 %s68, %s70
      %s72 = ssub.s32 %s26, %s38
      %s73 = sor.u32 %s71, %s72
      %p74 = scmp.eq.s32.totalorder %s73, 0
      %s76 = sadd.s32 %s75, 1
      %s77 = scalar_select %p74, %s75, %s76
      %p80 = pneg %p74
      %p81 = scmp.eq.s32.totalorder %s19, 3
      %p82 = por %p80, %p81
      %p83 = scmp.ne.s32.totalorder %s75, %s78
      %p84 = scmp.eq.s32.totalorder %s19, 0
      %p85 = por %p83, %p84
      %p86 = scmp.ne.s32.totalorder %s75, %s78
      %p87 = scmp.eq.s32.totalorder %s24, 3
      %p88 = por %p86, %p87
      %p89 = scmp.ne.s32.totalorder %s78, %s79
      %p90 = scmp.eq.s32.totalorder %s24, 0
      %p91 = por %p89, %p90
      %p92 = scmp.ne.s32.totalorder %s78, %s79
      %p93 = scmp.eq.s32.totalorder %s25, 3
      %p94 = por %p92, %p93
      %p96 = scmp.ne.s32.totalorder %s79, %s95
      %p97 = scmp.eq.s32.totalorder %s25, 0
      %p98 = por %p96, %p97
      %s100 = sadd.s32 %s99, 1
      %p103 = scmp.eq.s32.totalorder %s19, 3
      %p104 = scmp.ne.s32.totalorder %s99, %s101
      %p105 = scmp.eq.s32.totalorder %s19, 0
      %p106 = por %p104, %p105
      %p107 = scmp.ne.s32.totalorder %s99, %s101
      %p108 = scmp.eq.s32.totalorder %s24, 3
      %p109 = por %p107, %p108
      %p110 = scmp.ne.s32.totalorder %s101, %s102
      %p111 = scmp.eq.s32.totalorder %s24, 0
      %p112 = por %p110, %p111
      %p113 = scmp.ne.s32.totalorder %s101, %s102
      %p114 = scmp.eq.s32.totalorder %s25, 3
      %p115 = por %p113, %p114
      %p117 = scmp.ne.s32.totalorder %s102, %s116
      %p118 = scmp.eq.s32.totalorder %s25, 0
      %p119 = por %p117, %p118
      %s120 = ssub.s32 %s26, %s38
      %p121 = scmp.eq.s32.totalorder %s120, 0
      %s123 = sadd.s32 %s122, 1
      %s124 = scalar_select %p121, %s122, %s123
      %p127 = pneg %p121
      %p128 = scmp.eq.s32.totalorder %s19, 3
      %p129 = por %p127, %p128
      %p130 = scmp.ne.s32.totalorder %s122, %s125
      %p131 = scmp.eq.s32.totalorder %s19, 0
      %p132 = por %p130, %p131
      %p133 = scmp.ne.s32.totalorder %s122, %s125
      %p134 = scmp.eq.s32.totalorder %s24, 3
      %p135 = por %p133, %p134
      %p136 = scmp.ne.s32.totalorder %s125, %s126
      %p137 = scmp.eq.s32.totalorder %s24, 0
      %p138 = por %p136, %p137
      %p139 = scmp.ne.s32.totalorder %s125, %s126
      %p140 = scmp.eq.s32.totalorder %s25, 3
      %p141 = por %p139, %p140
      %p143 = scmp.ne.s32.totalorder %s126, %s142
      %p144 = scmp.eq.s32.totalorder %s25, 0
      %p145 = por %p143, %p144
      %s146 = ssub.s32 %s26, %s38
      %p147 = scmp.eq.s32.totalorder %s146, 0
      %s149 = sadd.s32 %s148, 1
      %s150 = scalar_select %p147, %s148, %s149
      %p153 = pneg %p147
      %p154 = scmp.eq.s32.totalorder %s19, 3
      %p155 = por %p153, %p154
      %p156 = scmp.ne.s32.totalorder %s148, %s151
      %p157 = scmp.eq.s32.totalorder %s19, 0
      %p158 = por %p156, %p157
      %p159 = scmp.ne.s32.totalorder %s148, %s151
      %p160 = scmp.eq.s32.totalorder %s24, 3
      %p161 = por %p159, %p160
      %p162 = scmp.ne.s32.totalorder %s151, %s152
      %p163 = scmp.eq.s32.totalorder %s24, 0
      %p164 = por %p162, %p163
      %p165 = scmp.ne.s32.totalorder %s151, %s152
      %p166 = scmp.eq.s32.totalorder %s25, 3
      %p167 = por %p165, %p166
      %p169 = scmp.ne.s32.totalorder %s152, %s168
      %p170 = scmp.eq.s32.totalorder %s25, 0
      %p171 = por %p169, %p170
      %p172 = scmp.le.s32.totalorder 1, %s19
      %p173 = scmp.lt.s32.totalorder %s19, 5
      %p174 = pnand %p172, %p173
      %p175 = pneg %p174
      // Predicated region
      $region9: #{tpu_custom_call.1} parent=5 // pred_check
        _
      $region10: #{tpu_custom_call.1} parent=5 // pred_check_branch
        %177 = sbr.rel (%p174) target = $region12
      $region11: #{tpu_custom_call.1} parent=5 // pred_region
        %s178 = ssub.s32 %s19, 1
        // Predicated region
        $region13: #{tpu_custom_call.1} parent=11 // pred_check
          %p179 = pneg %p112
        $region14: #{tpu_custom_call.1} parent=11 // pred_check_branch
          %181 = sbr.rel (%p179) target = $region16
        $region15: #{tpu_custom_call.1} parent=11 // pred_region
          _
        $region16: #{tpu_custom_call.1} parent=11 // pred_fallthru
          _
      $region12: #{tpu_custom_call.1} parent=5 // pred_fallthru
        _
      %p182 = scmp.lt.s32.totalorder %s19, 4
      // Predicated region
      $region17: #{tpu_custom_call.1} parent=5 // pred_check
        %p183 = pneg %p182
      $region18: #{tpu_custom_call.1} parent=5 // pred_check_branch
        %185 = sbr.rel (%p183) target = $region20
      $region19: #{tpu_custom_call.1} parent=5 // pred_region
        // Predicated region
        $region21: #{tpu_custom_call.1} parent=19 // pred_check
          %p186 = pneg %p53
        $region22: #{tpu_custom_call.1} parent=19 // pred_check_branch
          %188 = sbr.rel (%p186) target = $region24
        $region23: #{tpu_custom_call.1} parent=19 // pred_region
          %s189 = sand.u32 %s43, 1
          %s190 = scalar_lea.sflag [#allocation5], %s189
          %s191 = sand.u32 %s43, 1
          %s192 = smul.addr %s191, 8
          %s193 = scalar_lea.vmem [#allocation4], %s192
          %s195 = ssub.s32 128, 128
          %196 = vsyncadd %s190, %s195
          %s197 = sadd.s32 %s26, %s27
          %s198 = smul.addr %s197, 128
          %s199 = scalar_lea.hbm %s0, %s198
          %s201 = sshll.u32 %s193, 4
          %s202 = int_to_ptr.vmem [resolvable:$true] %s201
          %204 = dma.hbm_to_vmem [thread:$0]  %s199, 128, %s202, %s190
        $region24: #{tpu_custom_call.1} parent=19 // pred_fallthru
          _
        // Predicated region
        $region25: #{tpu_custom_call.1} parent=19 // pred_check
          %p205 = pneg %p85
        $region26: #{tpu_custom_call.1} parent=19 // pred_check_branch
          %207 = sbr.rel (%p205) target = $region28
        $region27: #{tpu_custom_call.1} parent=19 // pred_region
          %s208 = sand.u32 %s75, 1
          %s209 = scalar_lea.sflag [#allocation8], %s208
          %s210 = sand.u32 %s75, 1
          %s211 = smul.addr %s210, 8
          %s212 = scalar_lea.vmem [#allocation7], %s211
          %p213 = scmp.lt.s32.totalorder %s27, 1
          %s214 = scalar_select %p213, %s27, 1
          %s216 = ssub.s32 128, 128
          %217 = vsyncadd %s209, %s216
          %s218 = sadd.s32 %s26, %s214
          %s219 = smul.addr %s218, 128
          %s220 = scalar_lea.hbm %s1, %s219
          %s222 = sshll.u32 %s212, 4
          %s223 = int_to_ptr.vmem [resolvable:$true] %s222
          %225 = dma.hbm_to_vmem [thread:$0]  %s220, 128, %s223, %s209
        $region28: #{tpu_custom_call.1} parent=19 // pred_fallthru
          _
      $region20: #{tpu_custom_call.1} parent=5 // pred_fallthru
        _
      %p226 = scmp.le.s32.totalorder 1, %s19
      %p227 = scmp.lt.s32.totalorder %s19, 5
      %p228 = pnand %p226, %p227
      %p229 = pneg %p228
      // Predicated region
      $region29: #{tpu_custom_call.1} parent=5 // pred_check
        _
      $region30: #{tpu_custom_call.1} parent=5 // pred_check_branch
        %231 = sbr.rel (%p228) target = $region32
      $region31: #{tpu_custom_call.1} parent=5 // pred_region
        %s232 = ssub.s32 %s19, 1
        %s233 = sand.u32 %s46, 1
        %s234 = scalar_lea.sflag [#allocation5], %s233
        %s235 = sand.u32 %s46, 1
        %s236 = smul.addr %s235, 8
        %s237 = scalar_lea.vmem [#allocation4], %s236
        // Predicated region
        $region33: #{tpu_custom_call.1} parent=31 // pred_check
          %p238 = pneg %p59
        $region34: #{tpu_custom_call.1} parent=31 // pred_check_branch
          %240 = sbr.rel (%p238) target = $region36
        $region35: #{tpu_custom_call.1} parent=31 // pred_region
          %241 = dma.done %s234, 128
        $region36: #{tpu_custom_call.1} parent=31 // pred_fallthru
          _
        %s242 = sand.u32 %s78, 1
        %s243 = scalar_lea.sflag [#allocation8], %s242
        %s244 = sand.u32 %s78, 1
        %s245 = smul.addr %s244, 8
        %s246 = scalar_lea.vmem [#allocation7], %s245
        // Predicated region
        $region37: #{tpu_custom_call.1} parent=31 // pred_check
          %p247 = pneg %p91
        $region38: #{tpu_custom_call.1} parent=31 // pred_check_branch
          %249 = sbr.rel (%p247) target = $region40
        $region39: #{tpu_custom_call.1} parent=31 // pred_region
          %250 = dma.done %s243, 128
        $region40: #{tpu_custom_call.1} parent=31 // pred_fallthru
          _
        %s251 = sand.u32 %s46, 1
        %s252 = scalar_lea.sflag [#allocation5], %s251
        %s253 = sand.u32 %s46, 1
        %s254 = smul.addr %s253, 8
        %s255 = scalar_lea.vmem [#allocation4], %s254
        %p256 = pneg %p59
        %p257 = pneg %p56
        %s258 = sand.u32 %s78, 1
        %s259 = scalar_lea.sflag [#allocation8], %s258
        %s260 = sand.u32 %s78, 1
        %s261 = smul.addr %s260, 8
        %s262 = scalar_lea.vmem [#allocation7], %s261
        %p263 = pneg %p91
        %p264 = pneg %p88
        %p265 = pneg %p112
        %p266 = pneg %p109
        %p267 = pneg %p138
        %p268 = pneg %p135
        %p269 = pneg %p164
        %p270 = pneg %p161
        %p271 = scmp.lt.s32.totalorder %s29, 1
        %s272 = scalar_select %p271, %s29, 1
        %v273 = vld [vmem:[%s237] sm:$0xff]
        %v274 = vmul.f32 %v273, 10.0
        %275 = vmax.xlane.f32.xlu0 %v274
        %v276 = vpop.xlane.xlu0 %275
        %v277 = vsub.f32 %v274, %v276
        %v278 = vmul.f32 %v277, 1.442695
        %v279 = vpow.pop %v278
        %280 = vadd.xlane.f32.xlu0 %v279
        %v281 = vpop.xlane.xlu0 %280
        %v282 = vlog2.pop %v281
        %v283 = vmul.f32 %v282, 0.6931472
        %v284 = vsub.f32 %v277, %v283
        %p285 = scmp.eq.s32.totalorder %s29, 0
        // Predicated region
        $region41: #{tpu_custom_call.1} parent=31 // pred_check
          %p286 = pneg %p285
        $region42: #{tpu_custom_call.1} parent=31 // pred_check_branch
          %288 = sbr.rel (%p286) target = $region44
        $region43: #{tpu_custom_call.1} parent=31 // pred_region
          %v289 = vld [vmem:[%s246] sm:$0xff]
          %v290 = vld [vmem:[%s2] sm:$0x1]
          %v292 = vlaneseq
          %v293 = vshrl.u32 %v292, 7
          %v294 = vsub.s32 0, %v293
          %v295 = vrot.slane %v290, %v294
          %v297 = vsub.f32 %v289, %v295
          %v298 = vmul.f32 %v297, 16.0
          %299 = vmax.xlane.f32.xlu0 %v298
          %v300 = vpop.xlane.xlu0 %299
          %v301 = vsub.f32 %v298, %v300
          %v302 = vmul.f32 %v301, 1.442695
          %v303 = vpow.pop %v302
          %304 = vadd.xlane.f32.xlu0 %v303
          %v305 = vpop.xlane.xlu0 %304
          %v306 = vrcp.pop %v305
          %v307 = vmul.f32 %v303, %v306
          %v308 = vrot.slane %v289, 4
          %v309 = vadd.f32 %v289, %v308
          %v310 = vrot.slane %v309, 2
          %v311 = vadd.f32 %v309, %v310
          %v312 = vrot.slane %v311, 1
          %v313 = vadd.f32 %v311, %v312
          %314 = vst [vmem:[#allocation2] sm:$0xff] %v307
          %315 = vst [vmem:[#allocation3] sm:$0xff] %v284
          %v316 = vmul.f32 %v307, %v284
          %317 = vadd.xlane.f32.xlu0 %v316
          %v318 = vpop.xlane.xlu0 %317
          %v319 = vrot.slane %v318, 4
          %v320 = vadd.f32 %v318, %v319
          %v321 = vrot.slane %v320, 2
          %v322 = vadd.f32 %v320, %v321
          %v323 = vrot.slane %v322, 1
          %v324 = vadd.f32 %v322, %v323
          %s325 = vtos %v324
          %v326 = vstv %s325
          %327 = vst [vmem:[#allocation9] sm:$0x1] %v326
          %328 = vst [vmem:[#allocation10] sm:$0x1] %v313
        $region44: #{tpu_custom_call.1} parent=31 // pred_fallthru
          _
        %p329 = scmp.eq.s32.totalorder %s29, 1
        // Predicated region
        $region45: #{tpu_custom_call.1} parent=31 // pred_check
          %p330 = pneg %p329
        $region46: #{tpu_custom_call.1} parent=31 // pred_check_branch
          %332 = sbr.rel (%p330) target = $region48
        $region47: #{tpu_custom_call.1} parent=31 // pred_region
          %v333 = vld [vmem:[%s246] sm:$0xff]
          %v334 = vld [vmem:[%s2] sm:$0x1]
          %v336 = vlaneseq
          %v337 = vshrl.u32 %v336, 7
          %v338 = vsub.s32 0, %v337
          %v339 = vrot.slane %v334, %v338
          %v341 = vsub.f32 %v333, %v339
          %v342 = vmul.f32 %v341, 16.0
          %343 = vmax.xlane.f32.xlu0 %v342
          %v344 = vpop.xlane.xlu0 %343
          %v345 = vsub.f32 %v342, %v344
          %v346 = vmul.f32 %v345, 1.442695
          %v347 = vpow.pop %v346
          %348 = vadd.xlane.f32.xlu0 %v347
          %v349 = vpop.xlane.xlu0 %348
          %v350 = vrcp.pop %v349
          %v351 = vmul.f32 %v347, %v350
          %v352 = vrot.slane %v333, 4
          %v353 = vadd.f32 %v333, %v352
          %v354 = vrot.slane %v353, 2
          %v355 = vadd.f32 %v353, %v354
          %v356 = vrot.slane %v355, 1
          %v357 = vadd.f32 %v355, %v356
          %v358 = vld [vmem:[#allocation2] sm:$0xff]
          %v359 = vadd.f32 %v358, %v351
          %360 = vst [vmem:[#allocation2] sm:$0xff] %v359
          %v361 = vmul.f32 %v351, %v284
          %362 = vadd.xlane.f32.xlu0 %v361
          %v363 = vpop.xlane.xlu0 %362
          %v364 = vrot.slane %v363, 4
          %v365 = vadd.f32 %v363, %v364
          %v366 = vrot.slane %v365, 2
          %v367 = vadd.f32 %v365, %v366
          %v368 = vrot.slane %v367, 1
          %v369 = vadd.f32 %v367, %v368
          %s370 = vtos %v369
          %v371 = vld [vmem:[#allocation3] sm:$0xff]
          %v372 = vadd.f32 %v371, %v284
          %v373 = vmul.f32 %v359, %v372
          %374 = vadd.xlane.f32.xlu0 %v373
          %v375 = vpop.xlane.xlu0 %374
          %v376 = vrot.slane %v375, 4
          %v377 = vadd.f32 %v375, %v376
          %v378 = vrot.slane %v377, 2
          %v379 = vadd.f32 %v377, %v378
          %v380 = vrot.slane %v379, 1
          %v381 = vadd.f32 %v379, %v380
          %s382 = vtos %v381
          %s383 = ssub.f32 %s370, %s382
          %v384 = vld [vmem:[#allocation9] sm:$0x1]
          %v385 = vstv %s383
          %v386 = vadd.f32 %v384, %v385
          %387 = vst [vmem:[#allocation9] sm:$0x1] %v386
          %v388 = vld [vmem:[#allocation10] sm:$0x1]
          %v389 = vadd.f32 %v388, %v357
          %390 = vst [vmem:[#allocation10] sm:$0x1] %v389
        $region48: #{tpu_custom_call.1} parent=31 // pred_fallthru
          _
        %p391 = scmp.ge.s32.totalorder %s29, 2
        // Predicated region
        $region49: #{tpu_custom_call.1} parent=31 // pred_check
          %p392 = pneg %p391
        $region50: #{tpu_custom_call.1} parent=31 // pred_check_branch
          %394 = sbr.rel (%p392) target = $region52
        $region51: #{tpu_custom_call.1} parent=31 // pred_region
          %v395 = vld [vmem:[#allocation9] sm:$0x1]
          %v396 = vld [vmem:[#allocation2] sm:$0xff]
          %v397 = vmul.f32 %v396, %v284
          %398 = vadd.xlane.f32.xlu0 %v397
          %v399 = vpop.xlane.xlu0 %398
          %v400 = vrot.slane %v399, 4
          %v401 = vadd.f32 %v399, %v400
          %v402 = vrot.slane %v401, 2
          %v403 = vadd.f32 %v401, %v402
          %v404 = vrot.slane %v403, 1
          %v405 = vadd.f32 %v403, %v404
          %s406 = vtos %v405
          %v407 = vstv %s406
          %v408 = vsub.f32 %v395, %v407
          %409 = vst [vmem:[#allocation9] sm:$0x1] %v408
        $region52: #{tpu_custom_call.1} parent=31 // pred_fallthru
          _
        // Predicated region
        $region53: #{tpu_custom_call.1} parent=31 // pred_check
          %p410 = pneg %p135
        $region54: #{tpu_custom_call.1} parent=31 // pred_check_branch
          %412 = sbr.rel (%p410) target = $region56
        $region55: #{tpu_custom_call.1} parent=31 // pred_region
          %s414 = ssub.s32 16, 16
          %415 = vsyncadd [#allocation6], %s414
          %s416 = smul.addr %s28, 16
          %s417 = scalar_lea.hbm %s3, %s416
          %s419 = sshll.u32 [#allocation9], 4
          %s420 = int_to_ptr.vmem [resolvable:$true] %s419
          %422 = dma.vmem_to_hbm [thread:$0]  %s420, 16, %s417, [#allocation6]
        $region56: #{tpu_custom_call.1} parent=31 // pred_fallthru
          _
        // Predicated region
        $region57: #{tpu_custom_call.1} parent=31 // pred_check
          %p423 = pneg %p161
        $region58: #{tpu_custom_call.1} parent=31 // pred_check_branch
          %425 = sbr.rel (%p423) target = $region60
        $region59: #{tpu_custom_call.1} parent=31 // pred_region
          %s427 = ssub.s32 16, 16
          %428 = vsyncadd [#allocation11], %s427
          %s429 = smul.addr %s28, 16
          %s430 = scalar_lea.hbm %s4, %s429
          %s432 = sshll.u32 [#allocation10], 4
          %s433 = int_to_ptr.vmem [resolvable:$true] %s432
          %435 = dma.vmem_to_hbm [thread:$0]  %s433, 16, %s430, [#allocation11]
        $region60: #{tpu_custom_call.1} parent=31 // pred_fallthru
          _
        // Predicated region
        $region61: #{tpu_custom_call.1} parent=31 // pred_check
          %p436 = pneg %p135
        $region62: #{tpu_custom_call.1} parent=31 // pred_check_branch
          %438 = sbr.rel (%p436) target = $region64
        $region63: #{tpu_custom_call.1} parent=31 // pred_region
          %439 = dma.done [#allocation6], 16
        $region64: #{tpu_custom_call.1} parent=31 // pred_fallthru
          _
        // Predicated region
        $region65: #{tpu_custom_call.1} parent=31 // pred_check
          %p440 = pneg %p161
        $region66: #{tpu_custom_call.1} parent=31 // pred_check_branch
          %442 = sbr.rel (%p440) target = $region68
        $region67: #{tpu_custom_call.1} parent=31 // pred_region
          %443 = dma.done [#allocation11], 16
        $region68: #{tpu_custom_call.1} parent=31 // pred_fallthru
          _
      $region32: #{tpu_custom_call.1} parent=5 // pred_fallthru
        _
      %p444 = scmp.le.s32.totalorder 2, %s19
      // Predicated region
      $region69: #{tpu_custom_call.1} parent=5 // pred_check
        %p445 = pneg %p444
      $region70: #{tpu_custom_call.1} parent=5 // pred_check_branch
        %447 = sbr.rel (%p445) target = $region72
      $region71: #{tpu_custom_call.1} parent=5 // pred_region
        %s448 = ssub.s32 %s19, 2
      $region72: #{tpu_custom_call.1} parent=5 // pred_fallthru
        _
    $region6: #{tpu_custom_call.1} parent=1 // loop_footer
      %s23 = sadd.s32 1, %s19
    $region7: #{tpu_custom_call.1} parent=1 // loop_footer_branch
      %18 = sbr.rel target = $region3
    $region8: #{tpu_custom_call.1} parent=1 // loop_exit
      _
    %449 = vsyncpa [#allocation5], 1
    %s450 = scalar_lea.sflag [#allocation5], 1
    %451 = vsyncpa %s450, 1
    %452 = vsyncpa [#allocation8], 1
    %s453 = scalar_lea.sflag [#allocation8], 1
    %454 = vsyncpa %s453, 1
    %455 = vsyncpa [#allocation6], 1
    %s456 = scalar_lea.sflag [#allocation6], 1
    %457 = vsyncpa %s456, 1
    %458 = vsyncpa [#allocation11], 1

</llo_original>
